<compile_context>
chip_gen: v7x
topology: tpu7x:2x2x1
jax: 0.10.0
libtpu: 0.0.40
codegen_flags: <defaults>
</compile_context>

<pallas_src>
import math

import jax
import jax.numpy as jnp
from jax.experimental import pallas as pl
from jax.experimental.pallas import tpu as pltpu

EPS = 1e-12  # torch.nn.functional.normalize default eps


def _round_up(v, m):
    return (v + m - 1) // m * m


def _cosine_classifier_kernel(x_ref, w_ref, o_ref):
    """o_tile = normalize_rows(x) @ normalize_rows(w_tile).T on the MXU."""
    x = x_ref[...].astype(jnp.float32)   # (B, D_pad)   resident across grid
    w = w_ref[...].astype(jnp.float32)   # (TN, D_pad)  streamed tile of W

    eps2 = EPS * EPS
    # 1 / max(||v||, eps)  ==  rsqrt(max(||v||^2, eps^2))  -> EUP, no VALU div.
    inv_x = jax.lax.rsqrt(
        jnp.maximum(jnp.sum(x * x, axis=-1, keepdims=True), eps2))   # (B, 1)
    inv_w = jax.lax.rsqrt(
        jnp.maximum(jnp.sum(w * w, axis=-1, keepdims=True), eps2))   # (TN, 1)

    # Row-scale both operands (lane broadcast, no relayout). The kernel is
    # HBM-bound on the W stream, so this VALU/XLU work hides under the DMA of
    # the next W tile.  (x's share is ~B/TN of it -> negligible; recomputed
    # per step so each grid iteration is independent / core-split safe.)
    xn = x * inv_x
    wn = w * inv_w

    # Contract the last (feature) dim of both operands directly; avoids any
    # XLU transpose of the (TN, D_pad) tile before the MXU push.
    o_ref[...] = jax.lax.dot_general(
        xn, wn,
        dimension_numbers=(((1,), (1,)), ((), ())),
        preferred_element_type=jnp.float32,
    ).astype(o_ref.dtype)


def classifier_forward(x, weight, *, max_tn=2048,
                       w_vmem_budget_bytes=4 * 1024 * 1024):
    """Classifier.forward with lin_blocks=0.

    Args:
      x:      (B, 1, D) float32
      weight: (N, D)    float32   (out_neurons, input_size)
      max_tn: upper cap on the class-tile size (multiple of 128).
      w_vmem_budget_bytes: per-buffer VMEM budget for one W tile
        (double-buffered by Pallas, so HBM stream uses 2x this).

    Returns:
      (B, 1, N) float32 cosine similarities.
    """
    # TODO(synk): lin_blocks > 0 (BatchNorm1d + Linear blocks) not implemented;
    # the module's default configuration uses lin_blocks=0.
    assert x.ndim == 3 and x.shape[1] == 1
    B, _, D = x.shape
    N, D_w = weight.shape
    assert D == D_w

    x2d = x.reshape(B, D)  # squeeze(1)

    # Feature dim padded to the 128-lane axis.  Class-tile TN is sized from
    # the VMEM budget (largest multiple of 128 whose (TN, D_pad) f32 tile fits
    # one buffer), capped at max_tn and at what N actually needs; N is then
    # padded up to a multiple of the chosen TN.  Zero padding is exact: padded
    # features add 0 to norms/dots; padded classes give 0 logits, sliced off.
    D_pad = _round_up(D, 128)
    bytes_per_w_row = D_pad * 4
    tn_budget = max(128, (w_vmem_budget_bytes // bytes_per_w_row) // 128 * 128)
    TN = max(128, min(tn_budget, max_tn, _round_up(N, 128)))
    N_pad = _round_up(N, TN)
    # TODO(synk): for very wide embeddings (D_pad*128*8B > VMEM budget) a K
    # (feature) grid axis with an f32 accumulator would keep TN large; not
    # needed for the module's typical sizes.

    if D_pad != D:
        x2d = jnp.pad(x2d, ((0, 0), (0, D_pad - D)))
        weight = jnp.pad(weight, ((0, 0), (0, D_pad - D)))
    if N_pad != N:
        weight = jnp.pad(weight, ((0, N_pad - N), (0, 0)))

    grid = (N_pad // TN,)

    out = pl.pallas_call(
        _cosine_classifier_kernel,
        out_shape=jax.ShapeDtypeStruct((B, N_pad), jnp.float32),
        grid_spec=pltpu.PrefetchScalarGridSpec(
            num_scalar_prefetch=0,
            grid=grid,
            in_specs=[
                # x: same block every grid step -> stays resident in VMEM.
                pl.BlockSpec((B, D_pad), lambda j: (0, 0)),
                # W: streamed (TN, D_pad) tiles, double-buffered by Pallas.
                pl.BlockSpec((TN, D_pad), lambda j: (j, 0)),
            ],
            out_specs=pl.BlockSpec((B, TN), lambda j: (0, j)),
        ),
        compiler_params=pltpu.CompilerParams(
            # Class tiles are fully independent -> shard across TensorCores
            # on megacore parts (v7x); harmless (sequential) elsewhere.
            dimension_semantics=("parallel",),
        ),
    )(x2d, weight)

    out = out[:, :N]             # drop padded classes
    return out.reshape(B, 1, N)  # unsqueeze(1)


def make_xavier_uniform_weight(key, out_neurons, input_size):
    """Deterministic xavier_uniform_ init for weight of shape (out, in)."""
    fan_in, fan_out = input_size, out_neurons
    bound = math.sqrt(6.0 / (fan_in + fan_out))
    return jax.random.uniform(
        key, (out_neurons, input_size), dtype=jnp.float32,
        minval=-bound, maxval=bound,
    )


def _reference(x, weight):
    xn = x[:, 0, :] / jnp.maximum(
        jnp.linalg.norm(x[:, 0, :], axis=-1, keepdims=True), EPS)
    wn = weight / jnp.maximum(
        jnp.linalg.norm(weight, axis=-1, keepdims=True), EPS)
    return (xn @ wn.T)[:, None, :]


def _check(out, ref, shape):
    assert out.shape == shape, out.shape
    assert jnp.all(out <= 1.0 + 1e-4) and jnp.all(out >= -1.0 - 1e-4)
    assert jnp.allclose(out, ref, atol=2e-5, rtol=2e-5)


if __name__ == "__main__":
    key = jax.random.PRNGKey(0)
    k1, k2, k3, k4, k5, k6 = jax.random.split(key, 6)

    # Case 1: tiny shapes (padding-dominated; exercises D/N pad, single tile).
    B, D, N = 4, 32, 64
    x = jax.random.normal(k1, (B, 1, D), dtype=jnp.float32)
    weight = make_xavier_uniform_weight(k2, N, D)
    out = jax.block_until_ready(classifier_forward(x, weight))
    _check(out, _reference(x, weight), (B, 1, N))

    # Case 2: force TN=128 via max_tn to exercise a multi-step grid
    # (N_pad=384 -> 3 class tiles) plus non-aligned D (feature padding).
    B2, D2, N2 = 8, 192, 300
    x2 = jax.random.normal(k3, (B2, 1, D2), dtype=jnp.float32)
    weight2 = make_xavier_uniform_weight(k4, N2, D2)
    out2 = jax.block_until_ready(classifier_forward(x2, weight2, max_tn=128))
    _check(out2, _reference(x2, weight2), (B2, 1, N2))

    # Case 3: default (budget-sized) TN path with N not a multiple of TN:
    # D=80 -> D_pad=128, TN=2048, N=3000 -> N_pad=4096 -> 2 grid steps.
    B3, D3, N3 = 2, 80, 3000
    x3 = jax.random.normal(k5, (B3, 1, D3), dtype=jnp.float32)
    weight3 = make_xavier_uniform_weight(k6, N3, D3)
    out3 = jax.block_until_ready(classifier_forward(x3, weight3))
    _check(out3, _reference(x3, weight3), (B3, 1, N3))

    print("KERNEL_OK")
</pallas_src>

<mosaic_0001>
module attributes {stable_mosaic.version = 11 : i64} {
  func.func @_cosine_classifier_kernel(%arg0: i32, %arg1: memref<4x128xf32, #tpu.memory_space<vmem>>, %arg2: memref<128x128xf32, #tpu.memory_space<vmem>>, %arg3: memref<4x128xf32, #tpu.memory_space<vmem>>) attributes {dimension_semantics = [#tpu.dimension_semantics<parallel>], iteration_bounds = array<i64: 1>, scalar_prefetch = 0 : i64, scratch_operands = 0 : i64, tpu.core_type = #tpu.core_type<tc>, window_params = [{pipeline_mode = #tpu.pipeline_mode<synchronous>, transform_indices = @transform_0, window_bounds = array<i64: 4, 128>}, {transform_indices = @transform_1, window_bounds = array<i64: 128, 128>}, {transform_indices = @transform_2, window_bounds = array<i64: 4, 128>}]} {
    %c0 = arith.constant 0 : index
    %c0_0 = arith.constant 0 : index
    %0 = vector.load %arg1[%c0, %c0_0] : memref<4x128xf32, #tpu.memory_space<vmem>>, vector<4x128xf32>
    %c0_1 = arith.constant 0 : index
    %c0_2 = arith.constant 0 : index
    %1 = vector.load %arg2[%c0_1, %c0_2] : memref<128x128xf32, #tpu.memory_space<vmem>>, vector<128x128xf32>
    %2 = arith.mulf %0, %0 : vector<4x128xf32>
    %cst = arith.constant dense<0.000000e+00> : vector<4xf32>
    %3 = vector.multi_reduction <add>, %2, %cst [1] : vector<4x128xf32> to vector<4xf32>
    %4 = vector.shape_cast %3 : vector<4xf32> to vector<4x1xf32>
    %cst_3 = arith.constant 1.000000e-24 : f32
    %5 = vector.broadcast %cst_3 : f32 to vector<4x1xf32>
    %6 = arith.maximumf %4, %5 : vector<4x1xf32>
    %7 = math.rsqrt %6 : vector<4x1xf32>
    %8 = arith.mulf %1, %1 : vector<128x128xf32>
    %cst_4 = arith.constant dense<0.000000e+00> : vector<128xf32>
    %9 = vector.multi_reduction <add>, %8, %cst_4 [1] : vector<128x128xf32> to vector<128xf32>
    %10 = vector.shape_cast %9 : vector<128xf32> to vector<128x1xf32>
    %cst_5 = arith.constant 1.000000e-24 : f32
    %11 = vector.broadcast %cst_5 : f32 to vector<128x1xf32>
    %12 = arith.maximumf %10, %11 : vector<128x1xf32>
    %13 = math.rsqrt %12 : vector<128x1xf32>
    %14 = vector.broadcast %7 : vector<4x1xf32> to vector<4x128xf32>
    %15 = arith.mulf %0, %14 : vector<4x128xf32>
    %16 = vector.broadcast %13 : vector<128x1xf32> to vector<128x128xf32>
    %17 = arith.mulf %1, %16 : vector<128x128xf32>
    %cst_6 = arith.constant dense<0.000000e+00> : vector<4x128xf32>
    %18 = tpu.matmul %15, %17, %cst_6 {dimension_numbers = #tpu.dot_dimension_numbers<[1], [1], [0], [0], [0, 0, 1, 0], [], []>} : vector<4x128xf32>, vector<128x128xf32>, vector<4x128xf32> -> vector<4x128xf32>
    %c0_7 = arith.constant 0 : index
    %c0_8 = arith.constant 0 : index
    %19 = vector.load %arg3[%c0_7, %c0_8] : memref<4x128xf32, #tpu.memory_space<vmem>>, vector<4x128xf32>
    tpu.vector_store %arg3[%c0_7, %c0_8], %18 {strides = array<i32>} : memref<4x128xf32, #tpu.memory_space<vmem>>, vector<4x128xf32>,
    return
  }
  func.func @transform_0(%arg0: i32) -> (i32, i32) {
    %c0_i32 = arith.constant 0 : i32
    %c0_i32_0 = arith.constant 0 : i32
    %c0_i32_1 = arith.constant 0 : i32
    return %c0_i32, %c0_i32_0 : i32, i32
  }
  func.func @transform_1(%arg0: i32) -> (i32, i32) {
    %c0_i32 = arith.constant 0 : i32
    %c0_i32_0 = arith.constant 0 : i32
    return %arg0, %c0_i32 : i32, i32
  }
  func.func @transform_2(%arg0: i32) -> (i32, i32) {
    %c0_i32 = arith.constant 0 : i32
    %c0_i32_0 = arith.constant 0 : i32
    return %c0_i32, %arg0 : i32, i32
  }
}

</mosaic_0001>

<llo_original>
// kernel: tpu_custom_call.1
$region0: #{tpu_custom_call.1}
  #allocation0 [shape = 'u32[]', space=smem, size = 0x4, offset = 0x4, fixed_abs, tag = 'smem constant byte address 0x4 - core index']
  #allocation1 [shape = 'u32[144,128]{1,0:T(1,128)}', space=vmem, size = 0x12000, scoped, tag = 'internal scratch']
  %s0 = inlined_call_operand.hbm [shape: f32[4,128], index: 0, kind: input, shape index: {}]
  %s1 = inlined_call_operand.hbm [shape: f32[128,128], index: 1, kind: input, shape index: {}]
  %s2 = inlined_call_operand.hbm [shape: f32[4,128], index: 2, kind: output, shape index: {}]
  %s3 = sld [smem:[#allocation0]]
  $region26: #{tpu_custom_call.1} parent=0
    _
  %s5 = ssub.s32 1, %s3
  %s6 = scalar_select 0, %s5, %s3
  $region1: #{tpu_custom_call.1} parent=0
    #allocation2 [shape = 'u8[2048]{0}', space=vmem, size = 0x800, scoped, tag = 'input window, operand 0, single buffered']
    #allocation3 [shape = 's32[1]{0}', space=sflag, size = 0x4, scoped, tag = 'scoped memory for tpu_custom_call.1']
    #allocation4 [shape = 's32[1]{0}', space=sflag, size = 0x4, scoped, tag = 'scoped memory for tpu_custom_call.1']
    #allocation5 [shape = 'u8[65536]{0}', space=vmem, size = 0x10000, scoped, tag = 'input window, operand 1, single buffered']
    #allocation6 [shape = 's32[1]{0}', space=sflag, size = 0x4, scoped, tag = 'scoped memory for tpu_custom_call.1']
    #allocation7 [shape = 'u8[2048]{0}', space=vmem, size = 0x800, scoped, tag = 'output window, operand 0, single buffered']
    %7 = vsyncpa [#allocation3], 0
    %8 = vsyncpa [#allocation6], 0
    %9 = vsyncpa [#allocation4], 0
    // Predicated region
    $region2: #{tpu_custom_call.1} parent=1 // pred_check
      _
    $region3: #{tpu_custom_call.1} parent=1 // pred_check_branch
      %11 = sbr.rel (0) target = $region5
    $region4: #{tpu_custom_call.1} parent=1 // pred_region
      %s13 = ssub.s32 64, 64
      %14 = vsyncadd [#allocation3], %s13
      %s16 = sshll.u32 [#allocation2], 4
      %s17 = int_to_ptr.vmem [resolvable:$true] %s16
      %19 = dma.hbm_to_vmem [thread:$0]  %s0, 64, %s17, [#allocation3]
    $region5: #{tpu_custom_call.1} parent=1 // pred_fallthru
      _
    // Predicated region
    $region6: #{tpu_custom_call.1} parent=1 // pred_check
      _
    $region7: #{tpu_custom_call.1} parent=1 // pred_check_branch
      %21 = sbr.rel (0) target = $region9
    $region8: #{tpu_custom_call.1} parent=1 // pred_region
      %s23 = ssub.s32 2048, 2048
      %24 = vsyncadd [#allocation6], %s23
      %s25 = sshll.u32 [#allocation5], 4
      %s26 = int_to_ptr.vmem [resolvable:$true] %s25
      %31 = dma.hbm_to_vmem [thread:$0]  %s1, 2048, %s26, [#allocation6], 128, 128, 8
    $region9: #{tpu_custom_call.1} parent=1 // pred_fallthru
      _
    // Predicated region
    $region10: #{tpu_custom_call.1} parent=1 // pred_check
      _
    $region11: #{tpu_custom_call.1} parent=1 // pred_check_branch
      %33 = sbr.rel (0) target = $region13
    $region12: #{tpu_custom_call.1} parent=1 // pred_region
      %34 = dma.done [#allocation3], 64
    $region13: #{tpu_custom_call.1} parent=1 // pred_fallthru
      _
    // Predicated region
    $region14: #{tpu_custom_call.1} parent=1 // pred_check
      _
    $region15: #{tpu_custom_call.1} parent=1 // pred_check_branch
      %36 = sbr.rel (0) target = $region17
    $region16: #{tpu_custom_call.1} parent=1 // pred_region
      %37 = dma.done [#allocation6], 2048
    $region17: #{tpu_custom_call.1} parent=1 // pred_fallthru
      _
    %v38 = vld [vmem:[#allocation2] sm:$0xf]
    %v39 = vld [vmem:[#allocation5] sm:$0xff]
    %v40 = vld [vmem:[#allocation5 + $0x8] sm:$0xff]
    %v41 = vld [vmem:[#allocation5 + $0x10] sm:$0xff]
    %v42 = vld [vmem:[#allocation5 + $0x18] sm:$0xff]
    %v43 = vld [vmem:[#allocation5 + $0x20] sm:$0xff]
    %v44 = vld [vmem:[#allocation5 + $0x28] sm:$0xff]
    %v45 = vld [vmem:[#allocation5 + $0x30] sm:$0xff]
    %v46 = vld [vmem:[#allocation5 + $0x38] sm:$0xff]
    %v47 = vld [vmem:[#allocation5 + $0x40] sm:$0xff]
    %v48 = vld [vmem:[#allocation5 + $0x48] sm:$0xff]
    %v49 = vld [vmem:[#allocation5 + $0x50] sm:$0xff]
    %v50 = vld [vmem:[#allocation5 + $0x58] sm:$0xff]
    %v51 = vld [vmem:[#allocation5 + $0x60] sm:$0xff]
    %v52 = vld [vmem:[#allocation5 + $0x68] sm:$0xff]
    %v53 = vld [vmem:[#allocation5 + $0x70] sm:$0xff]
    %v54 = vld [vmem:[#allocation5 + $0x78] sm:$0xff]
    %v55 = vmul.f32 %v38, %v38
    %vm56 = vcmask 1043456
    %v57 = vsel %vm56, %v55, 0.0
    %58 = vadd.xlane.f32.xlu0 %v57
    %v59 = vpop.xlane.xlu0 %58
    %v60 = vmax.f32 %v59, 1e-24
    %v61 = vrsqrt.pop %v60
    %v62 = vmul.f32 %v39, %v39
    %v63 = vmul.f32 %v40, %v40
    %v64 = vmul.f32 %v41, %v41
    %v65 = vmul.f32 %v42, %v42
    %v66 = vmul.f32 %v43, %v43
    %v67 = vmul.f32 %v44, %v44
    %v68 = vmul.f32 %v45, %v45
    %v69 = vmul.f32 %v46, %v46
    %v70 = vmul.f32 %v47, %v47
    %v71 = vmul.f32 %v48, %v48
    %v72 = vmul.f32 %v49, %v49
    %v73 = vmul.f32 %v50, %v50
    %v74 = vmul.f32 %v51, %v51
    %v75 = vmul.f32 %v52, %v52
    %v76 = vmul.f32 %v53, %v53
    %v77 = vmul.f32 %v54, %v54
    %78 = vadd.xlane.f32.xlu0 %v62
    %v79 = vpop.xlane.xlu0 %78
    %80 = vadd.xlane.f32.xlu0 %v63
    %v81 = vpop.xlane.xlu0 %80
    %82 = vadd.xlane.f32.xlu0 %v64
    %v83 = vpop.xlane.xlu0 %82
    %84 = vadd.xlane.f32.xlu0 %v65
    %v85 = vpop.xlane.xlu0 %84
    %86 = vadd.xlane.f32.xlu0 %v66
    %v87 = vpop.xlane.xlu0 %86
    %88 = vadd.xlane.f32.xlu0 %v67
    %v89 = vpop.xlane.xlu0 %88
    %90 = vadd.xlane.f32.xlu0 %v68
    %v91 = vpop.xlane.xlu0 %90
    %92 = vadd.xlane.f32.xlu0 %v69
    %v93 = vpop.xlane.xlu0 %92
    %94 = vadd.xlane.f32.xlu0 %v70
    %v95 = vpop.xlane.xlu0 %94
    %96 = vadd.xlane.f32.xlu0 %v71
    %v97 = vpop.xlane.xlu0 %96
    %98 = vadd.xlane.f32.xlu0 %v72
    %v99 = vpop.xlane.xlu0 %98
    %100 = vadd.xlane.f32.xlu0 %v73
    %v101 = vpop.xlane.xlu0 %100
    %102 = vadd.xlane.f32.xlu0 %v74
    %v103 = vpop.xlane.xlu0 %102
    %104 = vadd.xlane.f32.xlu0 %v75
    %v105 = vpop.xlane.xlu0 %104
    %106 = vadd.xlane.f32.xlu0 %v76
    %v107 = vpop.xlane.xlu0 %106
    %108 = vadd.xlane.f32.xlu0 %v77
    %v109 = vpop.xlane.xlu0 %108
    %v110 = vmax.f32 %v79, 1e-24
    %v111 = vmax.f32 %v81, 1e-24
    %v112 = vmax.f32 %v83, 1e-24
    %v113 = vmax.f32 %v85, 1e-24
    %v114 = vmax.f32 %v87, 1e-24
    %v115 = vmax.f32 %v89, 1e-24
    %v116 = vmax.f32 %v91, 1e-24
    %v117 = vmax.f32 %v93, 1e-24
    %v118 = vmax.f32 %v95, 1e-24
    %v119 = vmax.f32 %v97, 1e-24
    %v120 = vmax.f32 %v99, 1e-24
    %v121 = vmax.f32 %v101, 1e-24
    %v122 = vmax.f32 %v103, 1e-24
    %v123 = vmax.f32 %v105, 1e-24
    %v124 = vmax.f32 %v107, 1e-24
    %v125 = vmax.f32 %v109, 1e-24
    %v126 = vrsqrt.pop %v110
    %v127 = vrsqrt.pop %v111
    %v128 = vrsqrt.pop %v112
    %v129 = vrsqrt.pop %v113
    %v130 = vrsqrt.pop %v114
    %v131 = vrsqrt.pop %v115
    %v132 = vrsqrt.pop %v116
    %v133 = vrsqrt.pop %v117
    %v134 = vrsqrt.pop %v118
    %v135 = vrsqrt.pop %v119
    %v136 = vrsqrt.pop %v120
    %v137 = vrsqrt.pop %v121
    %v138 = vrsqrt.pop %v122
    %v139 = vrsqrt.pop %v123
    %v140 = vrsqrt.pop %v124
    %v141 = vrsqrt.pop %v125
    %v142 = vmul.f32 %v38, %v61
    %v143 = vmul.f32 %v39, %v126
    %v144 = vmul.f32 %v40, %v127
    %v145 = vmul.f32 %v41, %v128
    %v146 = vmul.f32 %v42, %v129
    %v147 = vmul.f32 %v43, %v130
    %v148 = vmul.f32 %v44, %v131
    %v149 = vmul.f32 %v45, %v132
    %v150 = vmul.f32 %v46, %v133
    %v151 = vmul.f32 %v47, %v134
    %v152 = vmul.f32 %v48, %v135
    %v153 = vmul.f32 %v49, %v136
    %v154 = vmul.f32 %v50, %v137
    %v155 = vmul.f32 %v51, %v138
    %v156 = vmul.f32 %v52, %v139
    %v157 = vmul.f32 %v53, %v140
    %v158 = vmul.f32 %v54, %v141
    %159 = vmatprep.subr.mxu0 0.0
    %160 = vmatpush1.xpose.msra.mxu0 %v143
    %161 = vmatprep.subr.mxu0 0.0
    %162 = vmatpush1.xpose.msra.mxu0 %v144
    %163 = vmatprep.subr.mxu0 0.0
    %164 = vmatpush1.xpose.msra.mxu0 %v145
    %165 = vmatprep.subr.mxu0 0.0
    %166 = vmatpush1.xpose.msra.mxu0 %v146
    %167 = vmatprep.subr.mxu0 0.0
    %168 = vmatpush1.xpose.msra.mxu0 %v147
    %169 = vmatprep.subr.mxu0 0.0
    %170 = vmatpush1.xpose.msra.mxu0 %v148
    %171 = vmatprep.subr.mxu0 0.0
    %172 = vmatpush1.xpose.msra.mxu0 %v149
    %173 = vmatprep.subr.mxu0 0.0
    %174 = vmatpush1.xpose.msra.mxu0 %v150
    %175 = vmatprep.subr.mxu0 0.0
    %176 = vmatpush1.xpose.msra.mxu0 %v151
    %177 = vmatprep.subr.mxu0 0.0
    %178 = vmatpush1.xpose.msra.mxu0 %v152
    %179 = vmatprep.subr.mxu0 0.0
    %180 = vmatpush1.xpose.msra.mxu0 %v153
    %181 = vmatprep.subr.mxu0 0.0
    %182 = vmatpush1.xpose.msra.mxu0 %v154
    %183 = vmatprep.subr.mxu0 0.0
    %184 = vmatpush1.xpose.msra.mxu0 %v155
    %185 = vmatprep.subr.mxu0 0.0
    %186 = vmatpush1.xpose.msra.mxu0 %v156
    %187 = vmatprep.subr.mxu0 0.0
    %188 = vmatpush1.xpose.msra.mxu0 %v157
    %189 = vmatprep.subr.mxu0 0.0
    %190 = vmatpush1.xpose.msra.mxu0 %v158
    %191 = vmatprep.subr.mxu0 0.0
    %192 = vmatpush1.xpose.msra.mxu0 0.0
    %193 = vmatprep.subr.mxu0 0.0
    %194 = vmatpush1.xpose.msra.mxu0 0.0
    %195 = vmatprep.subr.mxu0 0.0
    %196 = vmatpush1.xpose.msra.mxu0 0.0
    %197 = vmatprep.subr.mxu0 0.0
    %198 = vmatpush1.xpose.msra.mxu0 0.0
    %199 = vmatprep.subr.mxu0 0.0
    %200 = vmatpush1.xpose.msra.mxu0 0.0
    %201 = vmatprep.subr.mxu0 0.0
    %202 = vmatpush1.xpose.msra.mxu0 0.0
    %203 = vmatprep.subr.mxu0 0.0
    %204 = vmatpush1.xpose.msra.mxu0 0.0
    %205 = vmatprep.subr.mxu0 0.0
    %206 = vmatpush1.xpose.msra.mxu0 0.0
    %207 = vmatprep.subr.mxu0 0.0
    %208 = vmatpush1.xpose.msra.mxu0 0.0
    %209 = vmatprep.subr.mxu0 0.0
    %210 = vmatpush1.xpose.msra.mxu0 0.0
    %211 = vmatprep.subr.mxu0 0.0
    %212 = vmatpush1.xpose.msra.mxu0 0.0
    %213 = vmatprep.subr.mxu0 0.0
    %214 = vmatpush1.xpose.msra.mxu0 0.0
    %215 = vmatprep.subr.mxu0 0.0
    %216 = vmatpush1.xpose.msra.mxu0 0.0
    %217 = vmatprep.subr.mxu0 0.0
    %218 = vmatpush1.xpose.msra.mxu0 0.0
    %219 = vmatprep.subr.mxu0 0.0
    %220 = vmatpush1.xpose.msra.mxu0 0.0
    %221 = vmatprep.subr.mxu0 0.0
    %222 = vmatpush1.xpose.msra.mxu0 0.0
    %223 = vmatprep.mubr.f32.mxu0 0.0
    %224 = vmatmul.mubr.f32.gmra.mrb[0].mxu0 %v142
    %v225 = vpop.f32.mrb[0].mxu0
    %v226 = vadd.f32 0.0, %v225
    %v227 = vpop.f32.mrb[0].mxu0
    %228 = vdwg.mxu0
    %229 = vst [vmem:[#allocation7] sm:$0xf] %v226
    // Predicated region
    $region18: #{tpu_custom_call.1} parent=1 // pred_check
      _
    $region19: #{tpu_custom_call.1} parent=1 // pred_check_branch
      %231 = sbr.rel (0) target = $region21
    $region20: #{tpu_custom_call.1} parent=1 // pred_region
      %s233 = ssub.s32 64, 64
      %234 = vsyncadd [#allocation4], %s233
      %s236 = sshll.u32 [#allocation7], 4
      %s237 = int_to_ptr.vmem [resolvable:$true] %s236
      %239 = dma.vmem_to_hbm [thread:$0]  %s237, 64, %s2, [#allocation4]
    $region21: #{tpu_custom_call.1} parent=1 // pred_fallthru
      _
    // Predicated region
    $region22: #{tpu_custom_call.1} parent=1 // pred_check
      _
    $region23: #{tpu_custom_call.1} parent=1 // pred_check_branch
      %241 = sbr.rel (0) target = $region25
    $region24: #{tpu_custom_call.1} parent=1 // pred_region
      %242 = dma.done [#allocation4], 64
    $region25: #{tpu_custom_call.1} parent=1 // pred_fallthru
      _
    %243 = vsyncpa [#allocation3], 1
    %244 = vsyncpa [#allocation6], 1
    %245 = vsyncpa [#allocation4], 1

</llo_original>
